<compile_context>
chip_gen: v6e
topology: v6e:2x2x1
jax: 0.10.0
libtpu: 0.0.40
codegen_flags: <defaults>
</compile_context>

<pallas_src>
import jax
import jax.numpy as jnp
from jax.experimental import pallas as pl
from jax.experimental.pallas import tpu as pltpu

__version__ = "0.0.0"


def git_version(short: bool = True) -> str:
    # Deterministic synthetic stand-in for the repo's git_version() helper.
    return "deadbee" if short else "deadbeefdeadbeefdeadbeefdeadbeefdeadbeef"


# ---------------------------------------------------------------------------
# Pallas kernel: identity / pass-through tile copy.
# ---------------------------------------------------------------------------
def _identity_kernel(x_ref, o_ref):
    # TODO(synk): the abstract base class defines no math; concrete subclasses
    # fuse their real compute (matmul / conv / attention) between load and
    # store in THIS kernel rather than chaining copy + compute pallas_calls
    # (v5e: slowest HBM + single vector-store slot, so extra HBM round trips
    # are proportionally most expensive there).  When adding matmuls, size the
    # contraction/output tiles as 256-multiples (v6e/v7x MXU is 2x256^2) and
    # note v7x's MXU has no int8/int4 path — dequant int8 weights to bf16/fp8
    # before jnp.dot.
    o_ref[...] = x_ref[...]


# Per-buffer tile byte target.  in + out, each double-buffered by the
# BlockSpec pipeline => 4 x 8 MiB = 32 MiB, under the 48 MiB limit below and
# under v7x's 64 MiB physical VMEM.
_TILE_TARGET_BYTES = 8 * 1024 * 1024
_VMEM_LIMIT_BYTES = 48 * 1024 * 1024
_MIN_TILE_BYTES = 1 * 1024 * 1024          # don't shrink below ~1 MiB/tile
_MIN_GRID_STEPS = 4                        # >= 2 steps per v7x TensorCore

# Minimum sublane granularity per element size (sub-32-bit dtypes pack along
# sublanes: bf16 needs 16-row tiles, int8/fp8 need 32-row tiles).
_SUBLANE_GRANULARITY = {4: 8, 2: 16, 1: 32}


def _sublane_granularity(dtype) -> int:
    return _SUBLANE_GRANULARITY.get(jnp.dtype(dtype).itemsize, 8)


def _pick_tile(rows: int, cols: int, itemsize: int, target_bytes: int,
               granularity: int) -> tuple[int, int]:
    """Pick a (tile_r, tile_c) near `target_bytes`, lane-dense where possible."""
    row_bytes = cols * itemsize
    if granularity * row_bytes <= target_bytes:
        # Full-width tiles: keep the lane axis untiled (maximally lane-dense).
        row_budget = (target_bytes // row_bytes) // granularity * granularity
        tile_r = max(granularity, min(rows, row_budget))
        tile_c = cols
    else:
        # Even a minimum-height tile is over budget (short, very wide slab):
        # tile the lane axis too, multiples of 128, kept >= 512 so stores stay
        # unmasked vst rather than vst.msk.
        tile_r = min(rows, granularity)
        col_budget = (target_bytes // (tile_r * itemsize)) // 128 * 128
        tile_c = min(cols, max(512, max(128, col_budget)))
    return tile_r, tile_c


def _ensure_min_steps(tile_r: int, tile_c: int, rows: int, cols: int,
                      itemsize: int, granularity: int) -> tuple[int, int]:
    """Shrink the row tile (never below ~1 MiB) until there are >= 4 steps."""
    def steps(tr, tc):
        return pl.cdiv(rows, tr) * pl.cdiv(cols, tc)

    while steps(tile_r, tile_c) < _MIN_GRID_STEPS:
        new_r = (tile_r // 2) // granularity * granularity
        if new_r < granularity or new_r * tile_c * itemsize < _MIN_TILE_BYTES:
            break
        tile_r = new_r
    return tile_r, tile_c


def pallas_identity(x2d: jax.Array, *, skip_trivial: bool = False,
                    donate: bool = False,
                    tile_target_bytes: int = _TILE_TARGET_BYTES) -> jax.Array:
    """Run the pass-through kernel on a [rows, cols] slab.

    Contract (keep it when subclasses generalize the wrapper reshape):
      rows % sublane_granularity(dtype) == 0 (8 for f32, 16 for bf16,
      32 for int8/fp8), cols % 128 == 0, and cols should stay a *large*
      multiple of 128 so stores remain lane-dense (unmasked vst).

    donate=True aliases the output onto the input allocation
    (input_output_aliases={0: 0}).  That only avoids an extra HBM buffer when
    the caller runs this inside jax.jit with the slab donated
    (donate_argnums); otherwise XLA inserts a defensive copy.  For a true
    identity, skip_trivial=True is the genuinely zero-cost path.
    """
    if skip_trivial:
        return x2d

    rows, cols = x2d.shape
    itemsize = jnp.dtype(x2d.dtype).itemsize
    granularity = _sublane_granularity(x2d.dtype)
    assert rows % granularity == 0 and cols % 128 == 0, (rows, cols, x2d.dtype)
    slab_bytes = rows * cols * itemsize

    alias = {0: 0} if donate else {}
    cost = pl.CostEstimate(flops=0, transcendentals=0,
                           bytes_accessed=2 * slab_bytes)

    if slab_bytes <= tile_target_bytes:
        # Single block: no grid, no pipelining plumbing.
        return pl.pallas_call(
            _identity_kernel,
            out_shape=jax.ShapeDtypeStruct((rows, cols), x2d.dtype),
            in_specs=[pl.BlockSpec((rows, cols), lambda: (0, 0))],
            out_specs=pl.BlockSpec((rows, cols), lambda: (0, 0)),
            input_output_aliases=alias,
            cost_estimate=cost,
            compiler_params=pltpu.CompilerParams(
                vmem_limit_bytes=_VMEM_LIMIT_BYTES),
        )(x2d)

    # Multi-step path: BlockSpec auto-pipelining double-buffers HBM<->VMEM
    # DMAs; both grid axes are independent ("parallel") so v7x's two
    # TensorCores shard the grid (no-op on single-TC v5e/v6e).
    tile_r, tile_c = _pick_tile(rows, cols, itemsize, tile_target_bytes,
                                granularity)
    tile_r, tile_c = _ensure_min_steps(tile_r, tile_c, rows, cols, itemsize,
                                       granularity)
    grid = (pl.cdiv(rows, tile_r), pl.cdiv(cols, tile_c))
    return pl.pallas_call(
        _identity_kernel,
        out_shape=jax.ShapeDtypeStruct((rows, cols), x2d.dtype),
        grid=grid,
        in_specs=[pl.BlockSpec((tile_r, tile_c), lambda i, j: (i, j))],
        out_specs=pl.BlockSpec((tile_r, tile_c), lambda i, j: (i, j)),
        input_output_aliases=alias,
        cost_estimate=cost,
        compiler_params=pltpu.CompilerParams(
            dimension_semantics=("parallel", "parallel"),
            vmem_limit_bytes=_VMEM_LIMIT_BYTES,
        ),
    )(x2d)


# ---------------------------------------------------------------------------
# ModelInterface: JAX mirror of the PyTorch abstract base class.
# ---------------------------------------------------------------------------
class ModelInterface:
    def __init__(self, *args, **kwargs) -> None:
        self._model_version = f"{__version__}+{git_version(short=True)}"

    def forward(self, *args, **kwargs):
        # Exact semantics of the reference: unconditionally raise.
        error_msg = f"forward method not implemented in {self.__class__}"
        if len(args) > 0:
            error_msg += f"\n\targs: {args}"
        if len(kwargs) > 0:
            error_msg += f"\n\tkwargs: {kwargs}"
        raise NotImplementedError(error_msg)

    def __call__(self, *args, **kwargs):
        return self.forward(*args, **kwargs)

    def version(self) -> str:
        """Return version of the model (mirror of the torch.jit.export API)."""
        return self._model_version

    @classmethod
    def create_from_config(cls, configs):
        # Pure-Python config plumbing mirrored from the reference (no tensor
        # compute).  `module` entries are expected to be callables/classes.
        # TODO(synk): mutates the caller's configs dict (pop) to match the
        # reference behaviour.
        def _init_model(configs):
            module_dict = {}
            for key in list(configs.keys()):
                value = configs.get(key)
                if not isinstance(value, dict) or "module" not in value:
                    continue
                configs.pop(key)
                value = dict(value)
                submodule = value.pop("module")
                module_dict[key] = submodule(**value)
            return module_dict

        def _init_loss(configs):
            loss_funcs, loss_weight = {}, {}
            for key in list(configs.keys()):
                value = configs.pop(key)
                if "weight" in key:
                    loss_weight[key] = value
                else:
                    if not isinstance(value, dict) or "module" not in value:
                        continue
                    value = dict(value)
                    submodule = value.pop("module")
                    loss_funcs[key] = submodule(**value)
            return loss_funcs, loss_weight

        model_dict = _init_model(configs=configs)
        loss_funcs, loss_weight = _init_loss(configs=configs.pop("loss", {}))
        base_config = configs.get("base_config", {})
        return cls(**model_dict, **base_config,
                   loss_funcs=loss_funcs, loss_weight=loss_weight)


# ---------------------------------------------------------------------------
# Demo / self-test
# ---------------------------------------------------------------------------
if __name__ == "__main__":
    key = jax.random.PRNGKey(0)

    # Small NCHW input consistent with a typical model built on this interface.
    N, C, H, W = 2, 4, 16, 16
    x = jax.random.normal(key, (N, C, H, W), dtype=jnp.float32)

    model = ModelInterface()

    # 1) Interface semantics: forward must raise NotImplementedError.
    try:
        model(x)
        raise RuntimeError("forward() unexpectedly did not raise")
    except NotImplementedError:
        pass

    # 2) version() behaves like the reference.
    assert model.version() == f"{__version__}+{git_version(short=True)}"

    # 3) Single-block (grid-free) path on the demo input; bit-exact.
    x2d = x.reshape(N * C, H * W)  # [8, 256] lane-dense slab
    y2d = jax.block_until_ready(pallas_identity(x2d))
    y = y2d.reshape(N, C, H, W)
    assert y.shape == x.shape and y.dtype == x.dtype
    assert bool(jnp.all(y == x))

    # 4) dtype-aware sublane granularity: bf16 slab (16-row granularity).
    xb = jax.random.normal(jax.random.PRNGKey(1), (16, 256)).astype(jnp.bfloat16)
    yb = jax.block_until_ready(pallas_identity(xb))
    assert bool(jnp.all(yb == xb))

    # 5) Tiled row path with ragged last block: rows=136 (not a multiple of
    #    the 32-row tile), cols=512, small tile budget so the gridded,
    #    double-buffered "parallel" path runs at demo scale -> grid (5, 1).
    big = jax.random.normal(jax.random.PRNGKey(2), (136, 512), dtype=jnp.float32)
    big_out = jax.block_until_ready(
        pallas_identity(big, tile_target_bytes=64 * 1024))
    assert big_out.shape == big.shape and big_out.dtype == big.dtype
    assert bool(jnp.all(big_out == big))

    # 6) Column-tiling fallback for short, very wide slabs: rows=8, cols=2048
    #    with a 16 KiB budget -> tile (8, 512), grid (1, 4).
    wide = jax.random.normal(jax.random.PRNGKey(3), (8, 2048), dtype=jnp.float32)
    wide_out = jax.block_until_ready(
        pallas_identity(wide, tile_target_bytes=16 * 1024))
    assert bool(jnp.all(wide_out == wide))

    # 7) Aliased/donated path: only meaningful under jit with the slab donated.
    donated_src = jax.random.normal(jax.random.PRNGKey(4), (64, 256),
                                    dtype=jnp.float32)
    expected = donated_src + 0.0  # independent buffer for post-donation check
    donate_fn = jax.jit(lambda a: pallas_identity(a, donate=True),
                        donate_argnums=(0,))
    y_don = jax.block_until_ready(donate_fn(donated_src))
    assert bool(jnp.all(y_don == expected))

    # 8) Zero-cost elision path.
    assert pallas_identity(x2d, skip_trivial=True) is x2d

    print("KERNEL_OK")
</pallas_src>

<mosaic_0001>
module attributes {stable_mosaic.version = 11 : i64} {
  func.func @_identity_kernel(%arg0: memref<8x256xf32, #tpu.memory_space<vmem>>, %arg1: memref<8x256xf32, #tpu.memory_space<vmem>>) attributes {dimension_semantics = [], scalar_prefetch = 0 : i64, scratch_operands = 0 : i64, tpu.core_type = #tpu.core_type<tc>} {
    %c0 = arith.constant 0 : index
    %c0_0 = arith.constant 0 : index
    %0 = vector.load %arg0[%c0, %c0_0] : memref<8x256xf32, #tpu.memory_space<vmem>>, vector<8x256xf32>
    %c0_1 = arith.constant 0 : index
    %c0_2 = arith.constant 0 : index
    %1 = vector.load %arg1[%c0_1, %c0_2] : memref<8x256xf32, #tpu.memory_space<vmem>>, vector<8x256xf32>
    tpu.vector_store %arg1[%c0_1, %c0_2], %0 {strides = array<i32>} : memref<8x256xf32, #tpu.memory_space<vmem>>, vector<8x256xf32>,
    return
  }
}

</mosaic_0001>

<llo_original>
// kernel: tpu_custom_call.1
$region0: #{tpu_custom_call.1}
  #allocation0 [shape = 'u32[]', space=smem, size = 0x4, offset = 0x4, fixed_abs, tag = 'smem constant byte address 0x4 - core index']
  #allocation1 [shape = 'u32[144,128]{1,0:T(1,128)}', space=vmem, size = 0x12000, scoped, tag = 'internal scratch']
  %s0 = inlined_call_operand.hbm [shape: f32[8,256], index: 0, kind: input, shape index: {}]
  %s1 = inlined_call_operand.hbm [shape: f32[8,256], index: 1, kind: output, shape index: {}]
  %s2 = sld [smem:[#allocation0]]
  $region18: #{tpu_custom_call.1} parent=0
    _
  %s4 = ssub.s32 1, %s2
  %s5 = scalar_select 0, %s4, %s2
  $region1: #{tpu_custom_call.1} parent=0
    #allocation2 [shape = 'u8[8192]{0}', space=vmem, size = 0x2000, scoped, tag = 'input window, operand 0, single buffered']
    #allocation3 [shape = 's32[1]{0}', space=sflag, size = 0x4, scoped, tag = 'scoped memory for tpu_custom_call.1']
    #allocation4 [shape = 's32[1]{0}', space=sflag, size = 0x4, scoped, tag = 'scoped memory for tpu_custom_call.1']
    #allocation5 [shape = 'u8[8192]{0}', space=vmem, size = 0x2000, scoped, tag = 'output window, operand 0, single buffered']
    %6 = vsyncpa [#allocation3], 0
    %7 = vsyncpa [#allocation4], 0
    // Predicated region
    $region2: #{tpu_custom_call.1} parent=1 // pred_check
      _
    $region3: #{tpu_custom_call.1} parent=1 // pred_check_branch
      %9 = sbr.rel (0) target = $region5
    $region4: #{tpu_custom_call.1} parent=1 // pred_region
      %s11 = ssub.s32 256, 256
      %12 = vsyncadd [#allocation3], %s11
      %s14 = sshll.u32 [#allocation2], 4
      %s15 = int_to_ptr.vmem [resolvable:$true] %s14
      %17 = dma.hbm_to_vmem [thread:$0]  %s0, 256, %s15, [#allocation3]
    $region5: #{tpu_custom_call.1} parent=1 // pred_fallthru
      _
    // Predicated region
    $region6: #{tpu_custom_call.1} parent=1 // pred_check
      _
    $region7: #{tpu_custom_call.1} parent=1 // pred_check_branch
      %19 = sbr.rel (0) target = $region9
    $region8: #{tpu_custom_call.1} parent=1 // pred_region
      %20 = dma.done [#allocation3], 256
    $region9: #{tpu_custom_call.1} parent=1 // pred_fallthru
      _
    %v21 = vld [vmem:[#allocation2] sm:$0xff]
    %v22 = vld [vmem:[#allocation2 + $0x8] sm:$0xff]
    %23 = vst [vmem:[#allocation5] sm:$0xff] %v21
    %24 = vst [vmem:[#allocation5 + $0x8] sm:$0xff] %v22
    // Predicated region
    $region10: #{tpu_custom_call.1} parent=1 // pred_check
      _
    $region11: #{tpu_custom_call.1} parent=1 // pred_check_branch
      %26 = sbr.rel (0) target = $region13
    $region12: #{tpu_custom_call.1} parent=1 // pred_region
      %s28 = ssub.s32 256, 256
      %29 = vsyncadd [#allocation4], %s28
      %s31 = sshll.u32 [#allocation5], 4
      %s32 = int_to_ptr.vmem [resolvable:$true] %s31
      %34 = dma.vmem_to_hbm [thread:$0]  %s32, 256, %s1, [#allocation4]
    $region13: #{tpu_custom_call.1} parent=1 // pred_fallthru
      _
    // Predicated region
    $region14: #{tpu_custom_call.1} parent=1 // pred_check
      _
    $region15: #{tpu_custom_call.1} parent=1 // pred_check_branch
      %36 = sbr.rel (0) target = $region17
    $region16: #{tpu_custom_call.1} parent=1 // pred_region
      %37 = dma.done [#allocation4], 256
    $region17: #{tpu_custom_call.1} parent=1 // pred_fallthru
      _
    %38 = vsyncpa [#allocation3], 1
    %39 = vsyncpa [#allocation4], 1

</llo_original>
